<compile_context>
chip_gen: v7x
topology: tpu7x:2x2x1
jax: 0.10.0
libtpu: 0.0.40
codegen_flags: <defaults>
</compile_context>

<pallas_src>
import functools
import math

import jax
import jax.numpy as jnp
from jax import lax
from jax.experimental import pallas as pl
from jax.experimental.pallas import tpu as pltpu


def _gpt_embedding_kernel(ids_ref, pos_ref, tok_hbm, out_ref, staging, sem, *,
                          chunk, seq_len, vocab_size, d_model):
    """One grid step (s, b): gather `chunk` embedding rows from the HBM token
    table into a (chunk, D) VMEM staging buffer with all DMAs in flight, then
    fuse scale + positional add and store the full (chunk, D) tile."""
    s = pl.program_id(0)
    b = pl.program_id(1)
    base = b * seq_len + s * chunk
    scale = jnp.float32(math.sqrt(d_model))

    def row_copy(i):
        # Clamp like jnp.take to keep the DMA in bounds. (PyTorch nn.Embedding
        # would raise on out-of-range ids; here they map to the clamped row.)
        tok = jnp.clip(ids_ref[base + i], 0, vocab_size - 1)
        return pltpu.make_async_copy(tok_hbm.at[pl.ds(tok, 1), :],
                                     staging.at[pl.ds(i, 1), :], sem)

    unroll = min(8, chunk)

    # Fire all `chunk` row gathers before waiting: many DMAs in flight so the
    # gather is HBM-bandwidth-bound, not DMA-latency-bound.
    def issue(i, carry):
        row_copy(i).start()
        return carry
    lax.fori_loop(0, chunk, issue, 0, unroll=unroll)

    # Drain: identical descriptors; the single semaphore accumulates all
    # completions, each wait consumes one row's worth.
    def drain(i, carry):
        row_copy(i).wait()
        return carry
    lax.fori_loop(0, chunk, drain, 0, unroll=unroll)

    # Single vectorized epilogue + one unmasked, lane-dense (chunk, D) store.
    out_ref[...] = (staging[...] * scale + pos_ref[...]).astype(out_ref.dtype)


def _pick_chunk(seq_len, d_model, dtype_bytes, chunk_tokens):
    """Largest legal sequence chunk that fits the VMEM budget.

    Working set per step ~= staging (1x) + out (2x double-buffered) +
    pos (2x double-buffered) = 5 * chunk * D * dtype_bytes.  Budget 40 MiB so
    the plan also fits v7x's 64 MiB physical VMEM with headroom (v5e/v6e have
    128 MiB, so this is conservative there).
    """
    budget = 40 * 2 ** 20
    cap = max(8, budget // (5 * d_model * dtype_bytes))
    cap = min(cap, chunk_tokens)
    if seq_len <= cap:
        return seq_len
    c = (cap // 8) * 8
    while c >= 8:
        if seq_len % c == 0:
            return c
        c -= 8
    raise ValueError(
        f"seq_len={seq_len} has no multiple-of-8 divisor <= {cap}; pad S.")


def gpt_embedding(token_ids, tok_table, pos_table, *, chunk_tokens=512):
    """token_ids: [B, S] int32; tok_table: [V, D]; pos_table: [max_len, D]."""
    B, S = token_ids.shape
    V, D = tok_table.shape
    max_len, Dp = pos_table.shape
    assert D == Dp
    assert S <= max_len, f"Sequence length {S} exceeds max length {max_len}"

    dtype_bytes = jnp.dtype(tok_table.dtype).itemsize
    chunk = _pick_chunk(S, D, dtype_bytes, chunk_tokens)
    n_chunks = S // chunk

    ids_flat = token_ids.reshape(-1).astype(jnp.int32)
    pos_used = pos_table[:S].astype(tok_table.dtype)   # (S, D): full-dim block

    kernel = functools.partial(_gpt_embedding_kernel, chunk=chunk, seq_len=S,
                               vocab_size=V, d_model=D)

    # Explicit VMEM limit sized to the working set (v5e's default scoped limit
    # is only 16 MiB; v7x physical is 64 MiB, so cap there).
    vmem_needed = 5 * chunk * D * dtype_bytes
    vmem_limit = int(min(max(2 * vmem_needed, 32 * 2 ** 20), 64 * 2 ** 20))

    cost = pl.CostEstimate(
        flops=2 * B * S * D,
        transcendentals=0,
        bytes_accessed=(2 * B * S * D + S * D) * dtype_bytes + B * S * 4)

    return pl.pallas_call(
        kernel,
        out_shape=jax.ShapeDtypeStruct((B, S, D), tok_table.dtype),
        grid_spec=pltpu.PrefetchScalarGridSpec(
            num_scalar_prefetch=1,                 # token ids land in SMEM
            # s outer, b inner: the pos block (s-indexed) is not re-fetched
            # while the inner batch axis advances.
            grid=(n_chunks, B),
            in_specs=[
                # positional rows for this sequence chunk (grid-invariant in b)
                pl.BlockSpec((chunk, D), lambda s, b, ids: (s, 0)),
                # token table stays in HBM; rows gathered by manual DMA
                pl.BlockSpec(memory_space=pl.ANY),
            ],
            out_specs=pl.BlockSpec((pl.Squeezed(), chunk, D),
                                   lambda s, b, ids: (b, s, 0)),
            scratch_shapes=[
                pltpu.VMEM((chunk, D), tok_table.dtype),   # gather staging
                pltpu.SemaphoreType.DMA,                   # shared DMA sem
            ],
        ),
        compiler_params=pltpu.CompilerParams(
            dimension_semantics=("parallel", "parallel"),
            vmem_limit_bytes=vmem_limit),
        cost_estimate=cost,
    )(ids_flat, pos_used, tok_table)


if __name__ == "__main__":
    # small, module-consistent shapes
    vocab_size = 64
    max_len = 16
    d_model = 32
    batch = 2
    seq = 8

    key = jax.random.PRNGKey(0)
    k_tok, k_pos, k_ids = jax.random.split(key, 3)

    # deterministic parameter init, matching the PyTorch init distributions
    tok_table = (jax.random.normal(k_tok, (vocab_size, d_model), jnp.float32)
                 * (d_model ** -0.5))
    pos_table = (jax.random.normal(k_pos, (max_len, d_model), jnp.float32)
                 * 0.02)
    token_ids = jax.random.randint(k_ids, (batch, seq), 0, vocab_size,
                                   dtype=jnp.int32)

    out = gpt_embedding(token_ids, tok_table, pos_table)
    out = jax.block_until_ready(out)

    # reference check in plain JAX (eval mode: dropout = identity)
    ref = (jnp.take(tok_table, token_ids, axis=0) * math.sqrt(d_model)
           + pos_table[:seq][None, :, :])
    assert out.shape == (batch, seq, d_model)
    assert jnp.allclose(out, ref, atol=1e-5, rtol=1e-5)

    print("KERNEL_OK")
</pallas_src>

<mosaic_0001>
module attributes {stable_mosaic.version = 11 : i64} {
  func.func @_gpt_embedding_kernel(%arg0: i32, %arg1: i32, %arg2: memref<16xi32, #tpu.memory_space<smem>>, %arg3: memref<8x32xf32, #tpu.memory_space<vmem>>, %arg4: memref<64x32xf32, #tpu.memory_space<any>>, %arg5: memref<1x8x32xf32, #tpu.memory_space<vmem>>, %arg6: memref<8x32xf32, #tpu.memory_space<vmem>>, %arg7: memref<!tpu.dma_semaphore, #tpu.memory_space<semaphore_mem>>) attributes {dimension_semantics = [#tpu.dimension_semantics<parallel>, #tpu.dimension_semantics<parallel>], iteration_bounds = array<i64: 1, 2>, scalar_prefetch = 1 : i64, scratch_operands = 2 : i64, tpu.core_type = #tpu.core_type<tc>, window_params = [{transform_indices = @transform_0, window_bounds = array<i64: 8, 32>}, {}, {transform_indices = @transform_2, window_bounds = array<i64: 1, 8, 32>}]} {
    %c8_i32 = arith.constant 8 : i32
    %0 = arith.muli %arg1, %c8_i32 : i32
    %c8_i32_0 = arith.constant 8 : i32
    %1 = arith.muli %arg0, %c8_i32_0 : i32
    %2 = arith.addi %0, %1 : i32
    %c0_i32 = arith.constant 0 : i32
    %3 = arith.addi %2, %c0_i32 : i32
    %4 = arith.index_cast %3 : i32 to index
    %5 = memref.load %arg2[%4] : memref<16xi32, #tpu.memory_space<smem>>
    %c0_i32_1 = arith.constant 0 : i32
    %c63_i32 = arith.constant 63 : i32
    %6 = arith.maxsi %c0_i32_1, %5 : i32
    %7 = arith.minsi %c63_i32, %6 : i32
    %c0_i32_2 = arith.constant 0 : i32
    %8 = tpu.memref_slice %arg4[%7, %c0_i32_2] : memref<64x32xf32, #tpu.memory_space<any>> -> memref<1x32xf32, #tpu.memory_space<any>>
    %c0_i32_3 = arith.constant 0 : i32
    %9 = tpu.memref_slice %arg6[%c0_i32, %c0_i32_3] : memref<8x32xf32, #tpu.memory_space<vmem>> -> memref<1x32xf32, #tpu.memory_space<vmem>>
    tpu.enqueue_dma source(%8 : memref<1x32xf32, #tpu.memory_space<any>>) target(%9 : memref<1x32xf32, #tpu.memory_space<vmem>>) target_semaphore(%arg7 : memref<!tpu.dma_semaphore, #tpu.memory_space<semaphore_mem>>)
    %c1_i32 = arith.constant 1 : i32
    %10 = arith.addi %2, %c1_i32 : i32
    %11 = arith.index_cast %10 : i32 to index
    %12 = memref.load %arg2[%11] : memref<16xi32, #tpu.memory_space<smem>>
    %c0_i32_4 = arith.constant 0 : i32
    %c63_i32_5 = arith.constant 63 : i32
    %13 = arith.maxsi %c0_i32_4, %12 : i32
    %14 = arith.minsi %c63_i32_5, %13 : i32
    %c0_i32_6 = arith.constant 0 : i32
    %15 = tpu.memref_slice %arg4[%14, %c0_i32_6] : memref<64x32xf32, #tpu.memory_space<any>> -> memref<1x32xf32, #tpu.memory_space<any>>
    %c0_i32_7 = arith.constant 0 : i32
    %16 = tpu.memref_slice %arg6[%c1_i32, %c0_i32_7] : memref<8x32xf32, #tpu.memory_space<vmem>> -> memref<1x32xf32, #tpu.memory_space<vmem>>
    tpu.enqueue_dma source(%15 : memref<1x32xf32, #tpu.memory_space<any>>) target(%16 : memref<1x32xf32, #tpu.memory_space<vmem>>) target_semaphore(%arg7 : memref<!tpu.dma_semaphore, #tpu.memory_space<semaphore_mem>>)
    %c2_i32 = arith.constant 2 : i32
    %17 = arith.addi %2, %c2_i32 : i32
    %18 = arith.index_cast %17 : i32 to index
    %19 = memref.load %arg2[%18] : memref<16xi32, #tpu.memory_space<smem>>
    %c0_i32_8 = arith.constant 0 : i32
    %c63_i32_9 = arith.constant 63 : i32
    %20 = arith.maxsi %c0_i32_8, %19 : i32
    %21 = arith.minsi %c63_i32_9, %20 : i32
    %c0_i32_10 = arith.constant 0 : i32
    %22 = tpu.memref_slice %arg4[%21, %c0_i32_10] : memref<64x32xf32, #tpu.memory_space<any>> -> memref<1x32xf32, #tpu.memory_space<any>>
    %c0_i32_11 = arith.constant 0 : i32
    %23 = tpu.memref_slice %arg6[%c2_i32, %c0_i32_11] : memref<8x32xf32, #tpu.memory_space<vmem>> -> memref<1x32xf32, #tpu.memory_space<vmem>>
    tpu.enqueue_dma source(%22 : memref<1x32xf32, #tpu.memory_space<any>>) target(%23 : memref<1x32xf32, #tpu.memory_space<vmem>>) target_semaphore(%arg7 : memref<!tpu.dma_semaphore, #tpu.memory_space<semaphore_mem>>)
    %c3_i32 = arith.constant 3 : i32
    %24 = arith.addi %2, %c3_i32 : i32
    %25 = arith.index_cast %24 : i32 to index
    %26 = memref.load %arg2[%25] : memref<16xi32, #tpu.memory_space<smem>>
    %c0_i32_12 = arith.constant 0 : i32
    %c63_i32_13 = arith.constant 63 : i32
    %27 = arith.maxsi %c0_i32_12, %26 : i32
    %28 = arith.minsi %c63_i32_13, %27 : i32
    %c0_i32_14 = arith.constant 0 : i32
    %29 = tpu.memref_slice %arg4[%28, %c0_i32_14] : memref<64x32xf32, #tpu.memory_space<any>> -> memref<1x32xf32, #tpu.memory_space<any>>
    %c0_i32_15 = arith.constant 0 : i32
    %30 = tpu.memref_slice %arg6[%c3_i32, %c0_i32_15] : memref<8x32xf32, #tpu.memory_space<vmem>> -> memref<1x32xf32, #tpu.memory_space<vmem>>
    tpu.enqueue_dma source(%29 : memref<1x32xf32, #tpu.memory_space<any>>) target(%30 : memref<1x32xf32, #tpu.memory_space<vmem>>) target_semaphore(%arg7 : memref<!tpu.dma_semaphore, #tpu.memory_space<semaphore_mem>>)
    %c4_i32 = arith.constant 4 : i32
    %31 = arith.addi %2, %c4_i32 : i32
    %32 = arith.index_cast %31 : i32 to index
    %33 = memref.load %arg2[%32] : memref<16xi32, #tpu.memory_space<smem>>
    %c0_i32_16 = arith.constant 0 : i32
    %c63_i32_17 = arith.constant 63 : i32
    %34 = arith.maxsi %c0_i32_16, %33 : i32
    %35 = arith.minsi %c63_i32_17, %34 : i32
    %c0_i32_18 = arith.constant 0 : i32
    %36 = tpu.memref_slice %arg4[%35, %c0_i32_18] : memref<64x32xf32, #tpu.memory_space<any>> -> memref<1x32xf32, #tpu.memory_space<any>>
    %c0_i32_19 = arith.constant 0 : i32
    %37 = tpu.memref_slice %arg6[%c4_i32, %c0_i32_19] : memref<8x32xf32, #tpu.memory_space<vmem>> -> memref<1x32xf32, #tpu.memory_space<vmem>>
    tpu.enqueue_dma source(%36 : memref<1x32xf32, #tpu.memory_space<any>>) target(%37 : memref<1x32xf32, #tpu.memory_space<vmem>>) target_semaphore(%arg7 : memref<!tpu.dma_semaphore, #tpu.memory_space<semaphore_mem>>)
    %c5_i32 = arith.constant 5 : i32
    %38 = arith.addi %2, %c5_i32 : i32
    %39 = arith.index_cast %38 : i32 to index
    %40 = memref.load %arg2[%39] : memref<16xi32, #tpu.memory_space<smem>>
    %c0_i32_20 = arith.constant 0 : i32
    %c63_i32_21 = arith.constant 63 : i32
    %41 = arith.maxsi %c0_i32_20, %40 : i32
    %42 = arith.minsi %c63_i32_21, %41 : i32
    %c0_i32_22 = arith.constant 0 : i32
    %43 = tpu.memref_slice %arg4[%42, %c0_i32_22] : memref<64x32xf32, #tpu.memory_space<any>> -> memref<1x32xf32, #tpu.memory_space<any>>
    %c0_i32_23 = arith.constant 0 : i32
    %44 = tpu.memref_slice %arg6[%c5_i32, %c0_i32_23] : memref<8x32xf32, #tpu.memory_space<vmem>> -> memref<1x32xf32, #tpu.memory_space<vmem>>
    tpu.enqueue_dma source(%43 : memref<1x32xf32, #tpu.memory_space<any>>) target(%44 : memref<1x32xf32, #tpu.memory_space<vmem>>) target_semaphore(%arg7 : memref<!tpu.dma_semaphore, #tpu.memory_space<semaphore_mem>>)
    %c6_i32 = arith.constant 6 : i32
    %45 = arith.addi %2, %c6_i32 : i32
    %46 = arith.index_cast %45 : i32 to index
    %47 = memref.load %arg2[%46] : memref<16xi32, #tpu.memory_space<smem>>
    %c0_i32_24 = arith.constant 0 : i32
    %c63_i32_25 = arith.constant 63 : i32
    %48 = arith.maxsi %c0_i32_24, %47 : i32
    %49 = arith.minsi %c63_i32_25, %48 : i32
    %c0_i32_26 = arith.constant 0 : i32
    %50 = tpu.memref_slice %arg4[%49, %c0_i32_26] : memref<64x32xf32, #tpu.memory_space<any>> -> memref<1x32xf32, #tpu.memory_space<any>>
    %c0_i32_27 = arith.constant 0 : i32
    %51 = tpu.memref_slice %arg6[%c6_i32, %c0_i32_27] : memref<8x32xf32, #tpu.memory_space<vmem>> -> memref<1x32xf32, #tpu.memory_space<vmem>>
    tpu.enqueue_dma source(%50 : memref<1x32xf32, #tpu.memory_space<any>>) target(%51 : memref<1x32xf32, #tpu.memory_space<vmem>>) target_semaphore(%arg7 : memref<!tpu.dma_semaphore, #tpu.memory_space<semaphore_mem>>)
    %c7_i32 = arith.constant 7 : i32
    %52 = arith.addi %2, %c7_i32 : i32
    %53 = arith.index_cast %52 : i32 to index
    %54 = memref.load %arg2[%53] : memref<16xi32, #tpu.memory_space<smem>>
    %c0_i32_28 = arith.constant 0 : i32
    %c63_i32_29 = arith.constant 63 : i32
    %55 = arith.maxsi %c0_i32_28, %54 : i32
    %56 = arith.minsi %c63_i32_29, %55 : i32
    %c0_i32_30 = arith.constant 0 : i32
    %57 = tpu.memref_slice %arg4[%56, %c0_i32_30] : memref<64x32xf32, #tpu.memory_space<any>> -> memref<1x32xf32, #tpu.memory_space<any>>
    %c0_i32_31 = arith.constant 0 : i32
    %58 = tpu.memref_slice %arg6[%c7_i32, %c0_i32_31] : memref<8x32xf32, #tpu.memory_space<vmem>> -> memref<1x32xf32, #tpu.memory_space<vmem>>
    tpu.enqueue_dma source(%57 : memref<1x32xf32, #tpu.memory_space<any>>) target(%58 : memref<1x32xf32, #tpu.memory_space<vmem>>) target_semaphore(%arg7 : memref<!tpu.dma_semaphore, #tpu.memory_space<semaphore_mem>>)
    %c8_i32_32 = arith.constant 8 : i32
    %c0_i32_33 = arith.constant 0 : i32
    %59 = arith.addi %2, %c0_i32_33 : i32
    %60 = arith.index_cast %59 : i32 to index
    %61 = memref.load %arg2[%60] : memref<16xi32, #tpu.memory_space<smem>>
    %c0_i32_34 = arith.constant 0 : i32
    %c63_i32_35 = arith.constant 63 : i32
    %62 = arith.maxsi %c0_i32_34, %61 : i32
    %63 = arith.minsi %c63_i32_35, %62 : i32
    %c0_i32_36 = arith.constant 0 : i32
    %64 = tpu.memref_slice %arg4[%63, %c0_i32_36] : memref<64x32xf32, #tpu.memory_space<any>> -> memref<1x32xf32, #tpu.memory_space<any>>
    %c0_i32_37 = arith.constant 0 : i32
    %65 = tpu.memref_slice %arg6[%c0_i32_33, %c0_i32_37] : memref<8x32xf32, #tpu.memory_space<vmem>> -> memref<1x32xf32, #tpu.memory_space<vmem>>
    tpu.wait_dma2 semaphore(%arg7 : memref<!tpu.dma_semaphore, #tpu.memory_space<semaphore_mem>>) src(%64 : memref<1x32xf32, #tpu.memory_space<any>>) dst(%65 : memref<1x32xf32, #tpu.memory_space<vmem>>)
    %c1_i32_38 = arith.constant 1 : i32
    %66 = arith.addi %2, %c1_i32_38 : i32
    %67 = arith.index_cast %66 : i32 to index
    %68 = memref.load %arg2[%67] : memref<16xi32, #tpu.memory_space<smem>>
    %c0_i32_39 = arith.constant 0 : i32
    %c63_i32_40 = arith.constant 63 : i32
    %69 = arith.maxsi %c0_i32_39, %68 : i32
    %70 = arith.minsi %c63_i32_40, %69 : i32
    %c0_i32_41 = arith.constant 0 : i32
    %71 = tpu.memref_slice %arg4[%70, %c0_i32_41] : memref<64x32xf32, #tpu.memory_space<any>> -> memref<1x32xf32, #tpu.memory_space<any>>
    %c0_i32_42 = arith.constant 0 : i32
    %72 = tpu.memref_slice %arg6[%c1_i32_38, %c0_i32_42] : memref<8x32xf32, #tpu.memory_space<vmem>> -> memref<1x32xf32, #tpu.memory_space<vmem>>
    tpu.wait_dma2 semaphore(%arg7 : memref<!tpu.dma_semaphore, #tpu.memory_space<semaphore_mem>>) src(%71 : memref<1x32xf32, #tpu.memory_space<any>>) dst(%72 : memref<1x32xf32, #tpu.memory_space<vmem>>)
    %c2_i32_43 = arith.constant 2 : i32
    %73 = arith.addi %2, %c2_i32_43 : i32
    %74 = arith.index_cast %73 : i32 to index
    %75 = memref.load %arg2[%74] : memref<16xi32, #tpu.memory_space<smem>>
    %c0_i32_44 = arith.constant 0 : i32
    %c63_i32_45 = arith.constant 63 : i32
    %76 = arith.maxsi %c0_i32_44, %75 : i32
    %77 = arith.minsi %c63_i32_45, %76 : i32
    %c0_i32_46 = arith.constant 0 : i32
    %78 = tpu.memref_slice %arg4[%77, %c0_i32_46] : memref<64x32xf32, #tpu.memory_space<any>> -> memref<1x32xf32, #tpu.memory_space<any>>
    %c0_i32_47 = arith.constant 0 : i32
    %79 = tpu.memref_slice %arg6[%c2_i32_43, %c0_i32_47] : memref<8x32xf32, #tpu.memory_space<vmem>> -> memref<1x32xf32, #tpu.memory_space<vmem>>
    tpu.wait_dma2 semaphore(%arg7 : memref<!tpu.dma_semaphore, #tpu.memory_space<semaphore_mem>>) src(%78 : memref<1x32xf32, #tpu.memory_space<any>>) dst(%79 : memref<1x32xf32, #tpu.memory_space<vmem>>)
    %c3_i32_48 = arith.constant 3 : i32
    %80 = arith.addi %2, %c3_i32_48 : i32
    %81 = arith.index_cast %80 : i32 to index
    %82 = memref.load %arg2[%81] : memref<16xi32, #tpu.memory_space<smem>>
    %c0_i32_49 = arith.constant 0 : i32
    %c63_i32_50 = arith.constant 63 : i32
    %83 = arith.maxsi %c0_i32_49, %82 : i32
    %84 = arith.minsi %c63_i32_50, %83 : i32
    %c0_i32_51 = arith.constant 0 : i32
    %85 = tpu.memref_slice %arg4[%84, %c0_i32_51] : memref<64x32xf32, #tpu.memory_space<any>> -> memref<1x32xf32, #tpu.memory_space<any>>
    %c0_i32_52 = arith.constant 0 : i32
    %86 = tpu.memref_slice %arg6[%c3_i32_48, %c0_i32_52] : memref<8x32xf32, #tpu.memory_space<vmem>> -> memref<1x32xf32, #tpu.memory_space<vmem>>
    tpu.wait_dma2 semaphore(%arg7 : memref<!tpu.dma_semaphore, #tpu.memory_space<semaphore_mem>>) src(%85 : memref<1x32xf32, #tpu.memory_space<any>>) dst(%86 : memref<1x32xf32, #tpu.memory_space<vmem>>)
    %c4_i32_53 = arith.constant 4 : i32
    %87 = arith.addi %2, %c4_i32_53 : i32
    %88 = arith.index_cast %87 : i32 to index
    %89 = memref.load %arg2[%88] : memref<16xi32, #tpu.memory_space<smem>>
    %c0_i32_54 = arith.constant 0 : i32
    %c63_i32_55 = arith.constant 63 : i32
    %90 = arith.maxsi %c0_i32_54, %89 : i32
    %91 = arith.minsi %c63_i32_55, %90 : i32
    %c0_i32_56 = arith.constant 0 : i32
    %92 = tpu.memref_slice %arg4[%91, %c0_i32_56] : memref<64x32xf32, #tpu.memory_space<any>> -> memref<1x32xf32, #tpu.memory_space<any>>
    %c0_i32_57 = arith.constant 0 : i32
    %93 = tpu.memref_slice %arg6[%c4_i32_53, %c0_i32_57] : memref<8x32xf32, #tpu.memory_space<vmem>> -> memref<1x32xf32, #tpu.memory_space<vmem>>
    tpu.wait_dma2 semaphore(%arg7 : memref<!tpu.dma_semaphore, #tpu.memory_space<semaphore_mem>>) src(%92 : memref<1x32xf32, #tpu.memory_space<any>>) dst(%93 : memref<1x32xf32, #tpu.memory_space<vmem>>)
    %c5_i32_58 = arith.constant 5 : i32
    %94 = arith.addi %2, %c5_i32_58 : i32
    %95 = arith.index_cast %94 : i32 to index
    %96 = memref.load %arg2[%95] : memref<16xi32, #tpu.memory_space<smem>>
    %c0_i32_59 = arith.constant 0 : i32
    %c63_i32_60 = arith.constant 63 : i32
    %97 = arith.maxsi %c0_i32_59, %96 : i32
    %98 = arith.minsi %c63_i32_60, %97 : i32
    %c0_i32_61 = arith.constant 0 : i32
    %99 = tpu.memref_slice %arg4[%98, %c0_i32_61] : memref<64x32xf32, #tpu.memory_space<any>> -> memref<1x32xf32, #tpu.memory_space<any>>
    %c0_i32_62 = arith.constant 0 : i32
    %100 = tpu.memref_slice %arg6[%c5_i32_58, %c0_i32_62] : memref<8x32xf32, #tpu.memory_space<vmem>> -> memref<1x32xf32, #tpu.memory_space<vmem>>
    tpu.wait_dma2 semaphore(%arg7 : memref<!tpu.dma_semaphore, #tpu.memory_space<semaphore_mem>>) src(%99 : memref<1x32xf32, #tpu.memory_space<any>>) dst(%100 : memref<1x32xf32, #tpu.memory_space<vmem>>)
    %c6_i32_63 = arith.constant 6 : i32
    %101 = arith.addi %2, %c6_i32_63 : i32
    %102 = arith.index_cast %101 : i32 to index
    %103 = memref.load %arg2[%102] : memref<16xi32, #tpu.memory_space<smem>>
    %c0_i32_64 = arith.constant 0 : i32
    %c63_i32_65 = arith.constant 63 : i32
    %104 = arith.maxsi %c0_i32_64, %103 : i32
    %105 = arith.minsi %c63_i32_65, %104 : i32
    %c0_i32_66 = arith.constant 0 : i32
    %106 = tpu.memref_slice %arg4[%105, %c0_i32_66] : memref<64x32xf32, #tpu.memory_space<any>> -> memref<1x32xf32, #tpu.memory_space<any>>
    %c0_i32_67 = arith.constant 0 : i32
    %107 = tpu.memref_slice %arg6[%c6_i32_63, %c0_i32_67] : memref<8x32xf32, #tpu.memory_space<vmem>> -> memref<1x32xf32, #tpu.memory_space<vmem>>
    tpu.wait_dma2 semaphore(%arg7 : memref<!tpu.dma_semaphore, #tpu.memory_space<semaphore_mem>>) src(%106 : memref<1x32xf32, #tpu.memory_space<any>>) dst(%107 : memref<1x32xf32, #tpu.memory_space<vmem>>)
    %c7_i32_68 = arith.constant 7 : i32
    %108 = arith.addi %2, %c7_i32_68 : i32
    %109 = arith.index_cast %108 : i32 to index
    %110 = memref.load %arg2[%109] : memref<16xi32, #tpu.memory_space<smem>>
    %c0_i32_69 = arith.constant 0 : i32
    %c63_i32_70 = arith.constant 63 : i32
    %111 = arith.maxsi %c0_i32_69, %110 : i32
    %112 = arith.minsi %c63_i32_70, %111 : i32
    %c0_i32_71 = arith.constant 0 : i32
    %113 = tpu.memref_slice %arg4[%112, %c0_i32_71] : memref<64x32xf32, #tpu.memory_space<any>> -> memref<1x32xf32, #tpu.memory_space<any>>
    %c0_i32_72 = arith.constant 0 : i32
    %114 = tpu.memref_slice %arg6[%c7_i32_68, %c0_i32_72] : memref<8x32xf32, #tpu.memory_space<vmem>> -> memref<1x32xf32, #tpu.memory_space<vmem>>
    tpu.wait_dma2 semaphore(%arg7 : memref<!tpu.dma_semaphore, #tpu.memory_space<semaphore_mem>>) src(%113 : memref<1x32xf32, #tpu.memory_space<any>>) dst(%114 : memref<1x32xf32, #tpu.memory_space<vmem>>)
    %c8_i32_73 = arith.constant 8 : i32
    %c0 = arith.constant 0 : index
    %c0_74 = arith.constant 0 : index
    %115 = vector.load %arg6[%c0, %c0_74] : memref<8x32xf32, #tpu.memory_space<vmem>>, vector<8x32xf32>
    %cst = arith.constant 5.65685415 : f32
    %116 = vector.broadcast %cst : f32 to vector<8x32xf32>
    %117 = arith.mulf %115, %116 : vector<8x32xf32>
    %c0_75 = arith.constant 0 : index
    %c0_76 = arith.constant 0 : index
    %118 = vector.load %arg3[%c0_75, %c0_76] : memref<8x32xf32, #tpu.memory_space<vmem>>, vector<8x32xf32>
    %119 = arith.addf %117, %118 : vector<8x32xf32>
    %c0_77 = arith.constant 0 : index
    %c0_78 = arith.constant 0 : index
    %c0_79 = arith.constant 0 : index
    %120 = vector.load %arg5[%c0_77, %c0_78, %c0_79] : memref<1x8x32xf32, #tpu.memory_space<vmem>>, vector<1x8x32xf32>
    %121 = vector.shape_cast %120 : vector<1x8x32xf32> to vector<8x32xf32>
    %122 = vector.shape_cast %119 : vector<8x32xf32> to vector<1x8x32xf32>
    tpu.vector_store %arg5[%c0_77, %c0_78, %c0_79], %122 {strides = array<i32>} : memref<1x8x32xf32, #tpu.memory_space<vmem>>, vector<1x8x32xf32>,
    return
  }
  func.func @transform_0(%arg0: i32, %arg1: i32, %arg2: memref<16xi32, #tpu.memory_space<smem>>) -> (i32, i32) {
    %c0_i32 = arith.constant 0 : i32
    %c0_i32_0 = arith.constant 0 : i32
    return %arg0, %c0_i32 : i32, i32
  }
  func.func @transform_2(%arg0: i32, %arg1: i32, %arg2: memref<16xi32, #tpu.memory_space<smem>>) -> (i32, i32, i32) {
    %c0_i32 = arith.constant 0 : i32
    %c0_i32_0 = arith.constant 0 : i32
    return %arg1, %arg0, %c0_i32 : i32, i32, i32
  }
}

</mosaic_0001>

<llo_original>
// kernel: tpu_custom_call.1
$region0: #{tpu_custom_call.1}
  #allocation0 [shape = 'u32[]', space=smem, size = 0x4, offset = 0x4, fixed_abs, tag = 'smem constant byte address 0x4 - core index']
  #allocation1 [shape = 'u32[144,128]{1,0:T(1,128)}', space=vmem, size = 0x12000, scoped, tag = 'internal scratch']
  #allocation2 [shape = 'f32[8,32]{1,0:T(8,128)}', space=vmem, size = 0x1000, scoped, tag = 'scratch operand']
  #allocation3 [shape = 's32[1]{0}', space=sflag, size = 0x4, scoped, tag = 'scratch operand']
  #allocation4 [shape = 's32[1]{0}', space=sflag, size = 0x4, scoped, tag = 'scoped memory for tpu_custom_call.1']
  #allocation5 [shape = 'u8[512]{0}', space=smem, size = 0x200, scoped, tag = 'prefetched SMEM operand 0']
  #allocation8 [shape = 's32[]', space=sflag, size = 0x4, offset = 0, fixed_abs, tag = 'sflag constant byte address 0x0 - dummy sync flag']
  #allocation9 [shape = 's32[]', space=sflag, size = 0x4, offset = 0, fixed_abs, tag = 'sflag constant byte address 0x0 - dummy sync flag']
  #allocation10 [shape = 's32[]', space=sflag, size = 0x4, offset = 0, fixed_abs, tag = 'sflag constant byte address 0x0 - dummy sync flag']
  #allocation11 [shape = 's32[]', space=sflag, size = 0x4, offset = 0, fixed_abs, tag = 'sflag constant byte address 0x0 - dummy sync flag']
  #allocation12 [shape = 's32[]', space=sflag, size = 0x4, offset = 0, fixed_abs, tag = 'sflag constant byte address 0x0 - dummy sync flag']
  #allocation13 [shape = 's32[]', space=sflag, size = 0x4, offset = 0, fixed_abs, tag = 'sflag constant byte address 0x0 - dummy sync flag']
  #allocation14 [shape = 's32[]', space=sflag, size = 0x4, offset = 0, fixed_abs, tag = 'sflag constant byte address 0x0 - dummy sync flag']
  #allocation15 [shape = 's32[]', space=sflag, size = 0x4, offset = 0, fixed_abs, tag = 'sflag constant byte address 0x0 - dummy sync flag']
  %s0 = inlined_call_operand.vmem [shape: s32[16], index: 0, kind: input, shape index: {}]
  %s1 = inlined_call_operand.vmem [shape: f32[8,32], index: 1, kind: input, shape index: {}]
  %s2 = inlined_call_operand.vmem [shape: f32[64,32], index: 2, kind: input, shape index: {}]
  %s3 = inlined_call_operand.hbm [shape: f32[2,8,32], index: 3, kind: output, shape index: {}]
  %s4 = sld [smem:[#allocation0]]
  $region277: #{tpu_custom_call.1} parent=0
    _
  %s6 = ssub.s32 1, %s4
  %s7 = scalar_select 0, %s6, %s4
  %s8 = sshll.u32 %s0, 4
  %s9 = int_to_ptr.vmem [resolvable:$true] %s8
  %11 = dma.vmem_to_smem %s9, 16, [#allocation5], [#allocation4]
  %12 = dma.done [#allocation4], 16
  %13 = sfence
  $region1: #{tpu_custom_call.1} parent=0
    #allocation6 [shape = 'u8[8192]{0}', space=vmem, size = 0x2000, scoped, tag = 'output window, operand 0']
    #allocation7 [shape = 's32[2]{0}', space=sflag, size = 0x8, scoped, tag = 'scoped memory for tpu_custom_call.1']
    %14 = vsyncpa [#allocation7], 0
    %s15 = scalar_lea.sflag [#allocation7], 1
    %16 = vsyncpa %s15, 0
    loop: start=0, step=1, limit=4
    $region2: #{tpu_custom_call.1} parent=1 // loop_pre_header
      _
    $region3: #{tpu_custom_call.1} parent=1 // loop_header
      %s18 = sphi 0, %s22
      %p19 = scmp.ge.s32.totalorder %s18, 4
      %s25 = sphi 0, %s37
      %s26 = sphi 0, %s33
      %s27 = sphi 0, %s25
      %s28 = sphi 0, %s26
      %s29 = sphi 0, %s27
      %s30 = sphi 0, %s28
      %s40 = sphi 0, %s42
      %s43 = sphi 0, %s40
      %s44 = sphi 0, %s43
      %s60 = sphi 0, %s44
      %s68 = sphi 0, %s70
      %s71 = sphi 0, %s68
      %s72 = sphi 0, %s71
      %s88 = sphi 0, %s72
    $region4: #{tpu_custom_call.1} parent=1 // loop_header_branch
      %21 = sbr.rel (%p19) target = $region8
    $region5: #{tpu_custom_call.1} parent=1 // loop_body
      %s23 = ssub.s32 %s18, 1
      %s24 = ssub.s32 %s18, 2
      %s31 = sadd.s32 1, %s26
      %p32 = scmp.ge.s32.totalorder %s31, 2
      %s33 = scalar_select %p32, 0, %s31
      %s34 = sadd.s32 1, %s25
      %s35 = scalar_select %p32, %s34, %s25
      %p36 = scmp.ge.s32.totalorder %s35, 1
      %s37 = scalar_select %p36, 0, %s35
      %s38 = ssub.s32 %s25, %s37
      %p39 = scmp.eq.s32.totalorder %s38, 0
      %s41 = sadd.s32 %s40, 1
      %s42 = scalar_select %p39, %s40, %s41
      %p45 = pneg %p39
      %p46 = scmp.eq.s32.totalorder %s18, 1
      %p47 = por %p45, %p46
      %p48 = scmp.ne.s32.totalorder %s40, %s43
      %p49 = scmp.eq.s32.totalorder %s18, 0
      %p50 = por %p48, %p49
      %p51 = scmp.ne.s32.totalorder %s40, %s43
      %p52 = scmp.eq.s32.totalorder %s23, 1
      %p53 = por %p51, %p52
      %p54 = scmp.ne.s32.totalorder %s43, %s44
      %p55 = scmp.eq.s32.totalorder %s23, 0
      %p56 = por %p54, %p55
      %p57 = scmp.ne.s32.totalorder %s43, %s44
      %p58 = scmp.eq.s32.totalorder %s24, 1
      %p59 = por %p57, %p58
      %p61 = scmp.ne.s32.totalorder %s44, %s60
      %p62 = scmp.eq.s32.totalorder %s24, 0
      %p63 = por %p61, %p62
      %s64 = ssub.s32 %s26, %s33
      %s65 = ssub.s32 %s25, %s37
      %s66 = sor.u32 %s64, %s65
      %p67 = scmp.eq.s32.totalorder %s66, 0
      %s69 = sadd.s32 %s68, 1
      %s70 = scalar_select %p67, %s68, %s69
      %p73 = pneg %p67
      %p74 = scmp.eq.s32.totalorder %s18, 1
      %p75 = por %p73, %p74
      %p76 = scmp.ne.s32.totalorder %s68, %s71
      %p77 = scmp.eq.s32.totalorder %s18, 0
      %p78 = por %p76, %p77
      %p79 = scmp.ne.s32.totalorder %s68, %s71
      %p80 = scmp.eq.s32.totalorder %s23, 1
      %p81 = por %p79, %p80
      %p82 = scmp.ne.s32.totalorder %s71, %s72
      %p83 = scmp.eq.s32.totalorder %s23, 0
      %p84 = por %p82, %p83
      %p85 = scmp.ne.s32.totalorder %s71, %s72
      %p86 = scmp.eq.s32.totalorder %s24, 1
      %p87 = por %p85, %p86
      %p89 = scmp.ne.s32.totalorder %s72, %s88
      %p90 = scmp.eq.s32.totalorder %s24, 0
      %p91 = por %p89, %p90
      %p92 = scmp.le.s32.totalorder 1, %s18
      %p93 = scmp.lt.s32.totalorder %s18, 3
      %p94 = pnand %p92, %p93
      %p95 = pneg %p94
      // Predicated region
      $region9: #{tpu_custom_call.1} parent=5 // pred_check
        _
      $region10: #{tpu_custom_call.1} parent=5 // pred_check_branch
        %97 = sbr.rel (%p94) target = $region12
      $region11: #{tpu_custom_call.1} parent=5 // pred_region
        %s98 = ssub.s32 %s18, 1
        // Predicated region
        $region13: #{tpu_custom_call.1} parent=11 // pred_check
          %p99 = pneg %p56
        $region14: #{tpu_custom_call.1} parent=11 // pred_check_branch
          %101 = sbr.rel (%p99) target = $region16
        $region15: #{tpu_custom_call.1} parent=11 // pred_region
          %p102 = scmp.lt.s32.totalorder %s27, 0
          %s103 = scalar_select %p102, %s27, 0
          %s104 = smul.addr %s103, 8
          %s105 = scalar_lea.vmem %s1, %s104
        $region16: #{tpu_custom_call.1} parent=11 // pred_fallthru
          _
      $region12: #{tpu_custom_call.1} parent=5 // pred_fallthru
        _
      %p106 = scmp.lt.s32.totalorder %s18, 2
      // Predicated region
      $region17: #{tpu_custom_call.1} parent=5 // pred_check
        %p107 = pneg %p106
      $region18: #{tpu_custom_call.1} parent=5 // pred_check_branch
        %109 = sbr.rel (%p107) target = $region20
      $region19: #{tpu_custom_call.1} parent=5 // pred_region
        _
      $region20: #{tpu_custom_call.1} parent=5 // pred_fallthru
        _
      %p110 = scmp.le.s32.totalorder 1, %s18
      %p111 = scmp.lt.s32.totalorder %s18, 3
      %p112 = pnand %p110, %p111
      %p113 = pneg %p112
      // Predicated region
      $region21: #{tpu_custom_call.1} parent=5 // pred_check
        _
      $region22: #{tpu_custom_call.1} parent=5 // pred_check_branch
        %115 = sbr.rel (%p112) target = $region24
      $region23: #{tpu_custom_call.1} parent=5 // pred_region
        %s116 = ssub.s32 %s18, 1
        %p117 = scmp.lt.s32.totalorder %s27, 0
        %s118 = scalar_select %p117, %s27, 0
        %s119 = smul.addr %s118, 8
        %s120 = scalar_lea.vmem %s1, %s119
        %p121 = pneg %p56
        %p122 = pneg %p53
        %p123 = pneg %p84
        %p124 = pneg %p81
        %s125 = sand.u32 %s71, 1
        %s126 = scalar_lea.sflag [#allocation7], %s125
        %s127 = sand.u32 %s71, 1
        %s128 = smul.addr %s127, 8
        %s129 = scalar_lea.vmem [#allocation6], %s128
        %p130 = scmp.lt.s32.totalorder %s27, 0
        %s131 = scalar_select %p130, %s27, 0
        %s132 = smul.addr %s131, 8
        %s133 = scalar_lea.vmem %s1, %s132
        %s134 = smul.u32 %s28, 8
        %s135 = smul.u32 %s27, 8
        %s136 = sadd.s32 %s134, %s135
        %s137 = sld [smem:[#allocation5 + %s136]]
        %p138 = scmp.gt.s32.totalorder %s137, 0
        %s139 = scalar_select %p138, %s137, 0
        %p140 = scmp.lt.s32.totalorder %s139, 63
        %s141 = scalar_select %p140, %s139, 63
        %s142 = scalar_lea.vmem %s2, %s141
        %p144 = scmp.lt.u32.totalorder 1, 8
        %p145 = pneg %p144
        // Predicated region
        $region25: #{tpu_custom_call.1} parent=23 // pred_check
          _
        $region26: #{tpu_custom_call.1} parent=23 // pred_check_branch
          %147 = sbr.rel (%p144) target = $region28
        $region27: #{tpu_custom_call.1} parent=23 // pred_region
          %s162 = sand.u32 1, 7
          %p163 = scmp.eq.s32.totalorder %s162, 0
          %p164 = pneg %p163
          // Predicated region
          $region40: #{tpu_custom_call.1} parent=27 // pred_check
            _
          $region41: #{tpu_custom_call.1} parent=27 // pred_check_branch
            %166 = sbr.rel (%p163) target = $region43
          $region42: #{tpu_custom_call.1} parent=27 // pred_region
            %s167 = sand.u32 1, 7
            %s168 = ssub.s32 1, %s167
            %s169 = scalar_lea.vmem %s142, %s168
            %s170 = ssub.s32 1, %s167
            %s171 = scalar_lea.vmem [#allocation2], %s170
            %s172 = sshllo.u32 0, %s167
            loop: start=0, step=1, limit=1
            $region44: #{tpu_custom_call.1} parent=42 // loop_pre_header
              _
            $region45: #{tpu_custom_call.1} parent=42 // loop_header
              %s174 = sphi 0, %s178
              %p175 = scmp.ge.s32.totalorder %s174, 1
              %s179 = sphi %s169, %s169
              %s180 = sphi %s171, %s171
            $region46: #{tpu_custom_call.1} parent=42 // loop_header_branch
              %177 = sbr.rel (%p175) target = $region50
            $region47: #{tpu_custom_call.1} parent=42 // loop_body
              %v181 = vld [vmem:[%s179] sm:%s172]
              %182 = vst [vmem:[%s180] sm:%s172] %v181
            $region48: #{tpu_custom_call.1} parent=42 // loop_footer
              %s178 = sadd.s32 1, %s174
            $region49: #{tpu_custom_call.1} parent=42 // loop_footer_branch
              %173 = sbr.rel target = $region45
            $region50: #{tpu_custom_call.1} parent=42 // loop_exit
              _
          $region43: #{tpu_custom_call.1} parent=27 // pred_fallthru
            _
        $region28: #{tpu_custom_call.1} parent=23 // pred_fallthru
          _
        // Predicated region
        $region29: #{tpu_custom_call.1} parent=23 // pred_check
          %p148 = pneg %p144
        $region30: #{tpu_custom_call.1} parent=23 // pred_check_branch
          %150 = sbr.rel (%p148) target = $region32
        $region31: #{tpu_custom_call.1} parent=23 // pred_region
          %s151 = sshllo.u32 0, 1
          loop: start=0, step=1, limit=1
          $region33: #{tpu_custom_call.1} parent=31 // loop_pre_header
            _
          $region34: #{tpu_custom_call.1} parent=31 // loop_header
            %s153 = sphi 0, %s157
            %p154 = scmp.ge.s32.totalorder %s153, 1
            %s158 = sphi %s142, %s142
            %s159 = sphi [#allocation2], [#allocation2]
          $region35: #{tpu_custom_call.1} parent=31 // loop_header_branch
            %156 = sbr.rel (%p154) target = $region39
          $region36: #{tpu_custom_call.1} parent=31 // loop_body
            %v160 = vld [vmem:[%s158] sm:%s151]
            %161 = vst [vmem:[%s159] sm:%s151] %v160
          $region37: #{tpu_custom_call.1} parent=31 // loop_footer
            %s157 = sadd.s32 1, %s153
          $region38: #{tpu_custom_call.1} parent=31 // loop_footer_branch
            %152 = sbr.rel target = $region34
          $region39: #{tpu_custom_call.1} parent=31 // loop_exit
            _
        $region32: #{tpu_custom_call.1} parent=23 // pred_fallthru
          _
        // Predicated region
        $region51: #{tpu_custom_call.1} parent=23 // pred_check
          _
        $region52: #{tpu_custom_call.1} parent=23 // pred_check_branch
          %185 = sbr.rel (0) target = $region54
        $region53: #{tpu_custom_call.1} parent=23 // pred_region
          %186 = vsyncadd [#allocation3], 16
        $region54: #{tpu_custom_call.1} parent=23 // pred_fallthru
          _
        %s187 = sadd.s32 %s136, 1
        %s188 = sld [smem:[#allocation5 + %s187]]
        %p189 = scmp.gt.s32.totalorder %s188, 0
        %s190 = scalar_select %p189, %s188, 0
        %p191 = scmp.lt.s32.totalorder %s190, 63
        %s192 = scalar_select %p191, %s190, 63
        %s193 = scalar_lea.vmem %s2, %s192
        %s194 = scalar_lea.vmem [#allocation2], 1
        %p196 = scmp.lt.u32.totalorder 1, 8
        %p197 = pneg %p196
        // Predicated region
        $region55: #{tpu_custom_call.1} parent=23 // pred_check
          _
        $region56: #{tpu_custom_call.1} parent=23 // pred_check_branch
          %199 = sbr.rel (%p196) target = $region58
        $region57: #{tpu_custom_call.1} parent=23 // pred_region
          %s214 = sand.u32 1, 7
          %p215 = scmp.eq.s32.totalorder %s214, 0
          %p216 = pneg %p215
          // Predicated region
          $region70: #{tpu_custom_call.1} parent=57 // pred_check
            _
          $region71: #{tpu_custom_call.1} parent=57 // pred_check_branch
            %218 = sbr.rel (%p215) target = $region73
          $region72: #{tpu_custom_call.1} parent=57 // pred_region
            %s219 = sand.u32 1, 7
            %s220 = ssub.s32 1, %s219
            %s221 = scalar_lea.vmem %s193, %s220
            %s222 = ssub.s32 1, %s219
            %s223 = scalar_lea.vmem %s194, %s222 [#allocation2]
            %s224 = sshllo.u32 0, %s219
            loop: start=0, step=1, limit=1
            $region74: #{tpu_custom_call.1} parent=72 // loop_pre_header
              _
            $region75: #{tpu_custom_call.1} parent=72 // loop_header
              %s226 = sphi 0, %s230
              %p227 = scmp.ge.s32.totalorder %s226, 1
              %s231 = sphi %s221, %s221
              %s232 = sphi %s223, %s223
            $region76: #{tpu_custom_call.1} parent=72 // loop_header_branch
              %229 = sbr.rel (%p227) target = $region80
            $region77: #{tpu_custom_call.1} parent=72 // loop_body
              %v233 = vld [vmem:[%s231] sm:%s224]
              %234 = vst [vmem:[%s232] sm:%s224] %v233
            $region78: #{tpu_custom_call.1} parent=72 // loop_footer
              %s230 = sadd.s32 1, %s226
            $region79: #{tpu_custom_call.1} parent=72 // loop_footer_branch
              %225 = sbr.rel target = $region75
            $region80: #{tpu_custom_call.1} parent=72 // loop_exit
              _
          $region73: #{tpu_custom_call.1} parent=57 // pred_fallthru
            _
        $region58: #{tpu_custom_call.1} parent=23 // pred_fallthru
          _
        // Predicated region
        $region59: #{tpu_custom_call.1} parent=23 // pred_check
          %p200 = pneg %p196
        $region60: #{tpu_custom_call.1} parent=23 // pred_check_branch
          %202 = sbr.rel (%p200) target = $region62
        $region61: #{tpu_custom_call.1} parent=23 // pred_region
          %s203 = sshllo.u32 0, 1
          loop: start=0, step=1, limit=1
          $region63: #{tpu_custom_call.1} parent=61 // loop_pre_header
            _
          $region64: #{tpu_custom_call.1} parent=61 // loop_header
            %s205 = sphi 0, %s209
            %p206 = scmp.ge.s32.totalorder %s205, 1
            %s210 = sphi %s193, %s193
            %s211 = sphi %s194, %s194
          $region65: #{tpu_custom_call.1} parent=61 // loop_header_branch
            %208 = sbr.rel (%p206) target = $region69
          $region66: #{tpu_custom_call.1} parent=61 // loop_body
            %v212 = vld [vmem:[%s210] sm:%s203]
            %213 = vst [vmem:[%s211] sm:%s203] %v212
          $region67: #{tpu_custom_call.1} parent=61 // loop_footer
            %s209 = sadd.s32 1, %s205
          $region68: #{tpu_custom_call.1} parent=61 // loop_footer_branch
            %204 = sbr.rel target = $region64
          $region69: #{tpu_custom_call.1} parent=61 // loop_exit
            _
        $region62: #{tpu_custom_call.1} parent=23 // pred_fallthru
          _
        // Predicated region
        $region81: #{tpu_custom_call.1} parent=23 // pred_check
          _
        $region82: #{tpu_custom_call.1} parent=23 // pred_check_branch
          %237 = sbr.rel (0) target = $region84
        $region83: #{tpu_custom_call.1} parent=23 // pred_region
          %238 = vsyncadd [#allocation3], 16
        $region84: #{tpu_custom_call.1} parent=23 // pred_fallthru
          _
        %s239 = sadd.s32 %s136, 2
        %s240 = sld [smem:[#allocation5 + %s239]]
        %p241 = scmp.gt.s32.totalorder %s240, 0
        %s242 = scalar_select %p241, %s240, 0
        %p243 = scmp.lt.s32.totalorder %s242, 63
        %s244 = scalar_select %p243, %s242, 63
        %s245 = scalar_lea.vmem %s2, %s244
        %s246 = scalar_lea.vmem [#allocation2], 2
        %p248 = scmp.lt.u32.totalorder 1, 8
        %p249 = pneg %p248
        // Predicated region
        $region85: #{tpu_custom_call.1} parent=23 // pred_check
          _
        $region86: #{tpu_custom_call.1} parent=23 // pred_check_branch
          %251 = sbr.rel (%p248) target = $region88
        $region87: #{tpu_custom_call.1} parent=23 // pred_region
          %s266 = sand.u32 1, 7
          %p267 = scmp.eq.s32.totalorder %s266, 0
          %p268 = pneg %p267
          // Predicated region
          $region100: #{tpu_custom_call.1} parent=87 // pred_check
            _
          $region101: #{tpu_custom_call.1} parent=87 // pred_check_branch
            %270 = sbr.rel (%p267) target = $region103
          $region102: #{tpu_custom_call.1} parent=87 // pred_region
            %s271 = sand.u32 1, 7
            %s272 = ssub.s32 1, %s271
            %s273 = scalar_lea.vmem %s245, %s272
            %s274 = ssub.s32 1, %s271
            %s275 = scalar_lea.vmem %s246, %s274 [#allocation2]
            %s276 = sshllo.u32 0, %s271
            loop: start=0, step=1, limit=1
            $region104: #{tpu_custom_call.1} parent=102 // loop_pre_header
              _
            $region105: #{tpu_custom_call.1} parent=102 // loop_header
              %s278 = sphi 0, %s282
              %p279 = scmp.ge.s32.totalorder %s278, 1
              %s283 = sphi %s273, %s273
              %s284 = sphi %s275, %s275
            $region106: #{tpu_custom_call.1} parent=102 // loop_header_branch
              %281 = sbr.rel (%p279) target = $region110
            $region107: #{tpu_custom_call.1} parent=102 // loop_body
              %v285 = vld [vmem:[%s283] sm:%s276]
              %286 = vst [vmem:[%s284] sm:%s276] %v285
            $region108: #{tpu_custom_call.1} parent=102 // loop_footer
              %s282 = sadd.s32 1, %s278
            $region109: #{tpu_custom_call.1} parent=102 // loop_footer_branch
              %277 = sbr.rel target = $region105
            $region110: #{tpu_custom_call.1} parent=102 // loop_exit
              _
          $region103: #{tpu_custom_call.1} parent=87 // pred_fallthru
            _
        $region88: #{tpu_custom_call.1} parent=23 // pred_fallthru
          _
        // Predicated region
        $region89: #{tpu_custom_call.1} parent=23 // pred_check
          %p252 = pneg %p248
        $region90: #{tpu_custom_call.1} parent=23 // pred_check_branch
          %254 = sbr.rel (%p252) target = $region92
        $region91: #{tpu_custom_call.1} parent=23 // pred_region
          %s255 = sshllo.u32 0, 1
          loop: start=0, step=1, limit=1
          $region93: #{tpu_custom_call.1} parent=91 // loop_pre_header
            _
          $region94: #{tpu_custom_call.1} parent=91 // loop_header
            %s257 = sphi 0, %s261
            %p258 = scmp.ge.s32.totalorder %s257, 1
            %s262 = sphi %s245, %s245
            %s263 = sphi %s246, %s246
          $region95: #{tpu_custom_call.1} parent=91 // loop_header_branch
            %260 = sbr.rel (%p258) target = $region99
          $region96: #{tpu_custom_call.1} parent=91 // loop_body
            %v264 = vld [vmem:[%s262] sm:%s255]
            %265 = vst [vmem:[%s263] sm:%s255] %v264
          $region97: #{tpu_custom_call.1} parent=91 // loop_footer
            %s261 = sadd.s32 1, %s257
          $region98: #{tpu_custom_call.1} parent=91 // loop_footer_branch
            %256 = sbr.rel target = $region94
          $region99: #{tpu_custom_call.1} parent=91 // loop_exit
            _
        $region92: #{tpu_custom_call.1} parent=23 // pred_fallthru
          _
        // Predicated region
        $region111: #{tpu_custom_call.1} parent=23 // pred_check
          _
        $region112: #{tpu_custom_call.1} parent=23 // pred_check_branch
          %289 = sbr.rel (0) target = $region114
        $region113: #{tpu_custom_call.1} parent=23 // pred_region
          %290 = vsyncadd [#allocation3], 16
        $region114: #{tpu_custom_call.1} parent=23 // pred_fallthru
          _
        %s291 = sadd.s32 %s136, 3
        %s292 = sld [smem:[#allocation5 + %s291]]
        %p293 = scmp.gt.s32.totalorder %s292, 0
        %s294 = scalar_select %p293, %s292, 0
        %p295 = scmp.lt.s32.totalorder %s294, 63
        %s296 = scalar_select %p295, %s294, 63
        %s297 = scalar_lea.vmem %s2, %s296
        %s298 = scalar_lea.vmem [#allocation2], 3
        %p300 = scmp.lt.u32.totalorder 1, 8
        %p301 = pneg %p300
        // Predicated region
        $region115: #{tpu_custom_call.1} parent=23 // pred_check
          _
        $region116: #{tpu_custom_call.1} parent=23 // pred_check_branch
          %303 = sbr.rel (%p300) target = $region118
        $region117: #{tpu_custom_call.1} parent=23 // pred_region
          %s318 = sand.u32 1, 7
          %p319 = scmp.eq.s32.totalorder %s318, 0
          %p320 = pneg %p319
          // Predicated region
          $region130: #{tpu_custom_call.1} parent=117 // pred_check
            _
          $region131: #{tpu_custom_call.1} parent=117 // pred_check_branch
            %322 = sbr.rel (%p319) target = $region133
          $region132: #{tpu_custom_call.1} parent=117 // pred_region
            %s323 = sand.u32 1, 7
            %s324 = ssub.s32 1, %s323
            %s325 = scalar_lea.vmem %s297, %s324
            %s326 = ssub.s32 1, %s323
            %s327 = scalar_lea.vmem %s298, %s326 [#allocation2]
            %s328 = sshllo.u32 0, %s323
            loop: start=0, step=1, limit=1
            $region134: #{tpu_custom_call.1} parent=132 // loop_pre_header
              _
            $region135: #{tpu_custom_call.1} parent=132 // loop_header
              %s330 = sphi 0, %s334
              %p331 = scmp.ge.s32.totalorder %s330, 1
              %s335 = sphi %s325, %s325
              %s336 = sphi %s327, %s327
            $region136: #{tpu_custom_call.1} parent=132 // loop_header_branch
              %333 = sbr.rel (%p331) target = $region140
            $region137: #{tpu_custom_call.1} parent=132 // loop_body
              %v337 = vld [vmem:[%s335] sm:%s328]
              %338 = vst [vmem:[%s336] sm:%s328] %v337
            $region138: #{tpu_custom_call.1} parent=132 // loop_footer
              %s334 = sadd.s32 1, %s330
            $region139: #{tpu_custom_call.1} parent=132 // loop_footer_branch
              %329 = sbr.rel target = $region135
            $region140: #{tpu_custom_call.1} parent=132 // loop_exit
              _
          $region133: #{tpu_custom_call.1} parent=117 // pred_fallthru
            _
        $region118: #{tpu_custom_call.1} parent=23 // pred_fallthru
          _
        // Predicated region
        $region119: #{tpu_custom_call.1} parent=23 // pred_check
          %p304 = pneg %p300
        $region120: #{tpu_custom_call.1} parent=23 // pred_check_branch
          %306 = sbr.rel (%p304) target = $region122
        $region121: #{tpu_custom_call.1} parent=23 // pred_region
          %s307 = sshllo.u32 0, 1
          loop: start=0, step=1, limit=1
          $region123: #{tpu_custom_call.1} parent=121 // loop_pre_header
            _
          $region124: #{tpu_custom_call.1} parent=121 // loop_header
            %s309 = sphi 0, %s313
            %p310 = scmp.ge.s32.totalorder %s309, 1
            %s314 = sphi %s297, %s297
            %s315 = sphi %s298, %s298
          $region125: #{tpu_custom_call.1} parent=121 // loop_header_branch
            %312 = sbr.rel (%p310) target = $region129
          $region126: #{tpu_custom_call.1} parent=121 // loop_body
            %v316 = vld [vmem:[%s314] sm:%s307]
            %317 = vst [vmem:[%s315] sm:%s307] %v316
          $region127: #{tpu_custom_call.1} parent=121 // loop_footer
            %s313 = sadd.s32 1, %s309
          $region128: #{tpu_custom_call.1} parent=121 // loop_footer_branch
            %308 = sbr.rel target = $region124
          $region129: #{tpu_custom_call.1} parent=121 // loop_exit
            _
        $region122: #{tpu_custom_call.1} parent=23 // pred_fallthru
          _
        // Predicated region
        $region141: #{tpu_custom_call.1} parent=23 // pred_check
          _
        $region142: #{tpu_custom_call.1} parent=23 // pred_check_branch
          %341 = sbr.rel (0) target = $region144
        $region143: #{tpu_custom_call.1} parent=23 // pred_region
          %342 = vsyncadd [#allocation3], 16
        $region144: #{tpu_custom_call.1} parent=23 // pred_fallthru
          _
        %s343 = sadd.s32 %s136, 4
        %s344 = sld [smem:[#allocation5 + %s343]]
        %p345 = scmp.gt.s32.totalorder %s344, 0
        %s346 = scalar_select %p345, %s344, 0
        %p347 = scmp.lt.s32.totalorder %s346, 63
        %s348 = scalar_select %p347, %s346, 63
        %s349 = scalar_lea.vmem %s2, %s348
        %s350 = scalar_lea.vmem [#allocation2], 4
        %p352 = scmp.lt.u32.totalorder 1, 8
        %p353 = pneg %p352
        // Predicated region
        $region145: #{tpu_custom_call.1} parent=23 // pred_check
          _
        $region146: #{tpu_custom_call.1} parent=23 // pred_check_branch
          %355 = sbr.rel (%p352) target = $region148
        $region147: #{tpu_custom_call.1} parent=23 // pred_region
          %s370 = sand.u32 1, 7
          %p371 = scmp.eq.s32.totalorder %s370, 0
          %p372 = pneg %p371
          // Predicated region
          $region160: #{tpu_custom_call.1} parent=147 // pred_check
            _
          $region161: #{tpu_custom_call.1} parent=147 // pred_check_branch
            %374 = sbr.rel (%p371) target = $region163
          $region162: #{tpu_custom_call.1} parent=147 // pred_region
            %s375 = sand.u32 1, 7
            %s376 = ssub.s32 1, %s375
            %s377 = scalar_lea.vmem %s349, %s376
            %s378 = ssub.s32 1, %s375
            %s379 = scalar_lea.vmem %s350, %s378 [#allocation2]
            %s380 = sshllo.u32 0, %s375
            loop: start=0, step=1, limit=1
            $region164: #{tpu_custom_call.1} parent=162 // loop_pre_header
              _
            $region165: #{tpu_custom_call.1} parent=162 // loop_header
              %s382 = sphi 0, %s386
              %p383 = scmp.ge.s32.totalorder %s382, 1
              %s387 = sphi %s377, %s377
              %s388 = sphi %s379, %s379
            $region166: #{tpu_custom_call.1} parent=162 // loop_header_branch
              %385 = sbr.rel (%p383) target = $region170
            $region167: #{tpu_custom_call.1} parent=162 // loop_body
              %v389 = vld [vmem:[%s387] sm:%s380]
              %390 = vst [vmem:[%s388] sm:%s380] %v389
            $region168: #{tpu_custom_call.1} parent=162 // loop_footer
              %s386 = sadd.s32 1, %s382
            $region169: #{tpu_custom_call.1} parent=162 // loop_footer_branch
              %381 = sbr.rel target = $region165
            $region170: #{tpu_custom_call.1} parent=162 // loop_exit
              _
          $region163: #{tpu_custom_call.1} parent=147 // pred_fallthru
            _
        $region148: #{tpu_custom_call.1} parent=23 // pred_fallthru
          _
        // Predicated region
        $region149: #{tpu_custom_call.1} parent=23 // pred_check
          %p356 = pneg %p352
        $region150: #{tpu_custom_call.1} parent=23 // pred_check_branch
          %358 = sbr.rel (%p356) target = $region152
        $region151: #{tpu_custom_call.1} parent=23 // pred_region
          %s359 = sshllo.u32 0, 1
          loop: start=0, step=1, limit=1
          $region153: #{tpu_custom_call.1} parent=151 // loop_pre_header
            _
          $region154: #{tpu_custom_call.1} parent=151 // loop_header
            %s361 = sphi 0, %s365
            %p362 = scmp.ge.s32.totalorder %s361, 1
            %s366 = sphi %s349, %s349
            %s367 = sphi %s350, %s350
          $region155: #{tpu_custom_call.1} parent=151 // loop_header_branch
            %364 = sbr.rel (%p362) target = $region159
          $region156: #{tpu_custom_call.1} parent=151 // loop_body
            %v368 = vld [vmem:[%s366] sm:%s359]
            %369 = vst [vmem:[%s367] sm:%s359] %v368
          $region157: #{tpu_custom_call.1} parent=151 // loop_footer
            %s365 = sadd.s32 1, %s361
          $region158: #{tpu_custom_call.1} parent=151 // loop_footer_branch
            %360 = sbr.rel target = $region154
          $region159: #{tpu_custom_call.1} parent=151 // loop_exit
            _
        $region152: #{tpu_custom_call.1} parent=23 // pred_fallthru
          _
        // Predicated region
        $region171: #{tpu_custom_call.1} parent=23 // pred_check
          _
        $region172: #{tpu_custom_call.1} parent=23 // pred_check_branch
          %393 = sbr.rel (0) target = $region174
        $region173: #{tpu_custom_call.1} parent=23 // pred_region
          %394 = vsyncadd [#allocation3], 16
        $region174: #{tpu_custom_call.1} parent=23 // pred_fallthru
          _
        %s395 = sadd.s32 %s136, 5
        %s396 = sld [smem:[#allocation5 + %s395]]
        %p397 = scmp.gt.s32.totalorder %s396, 0
        %s398 = scalar_select %p397, %s396, 0
        %p399 = scmp.lt.s32.totalorder %s398, 63
        %s400 = scalar_select %p399, %s398, 63
        %s401 = scalar_lea.vmem %s2, %s400
        %s402 = scalar_lea.vmem [#allocation2], 5
        %p404 = scmp.lt.u32.totalorder 1, 8
        %p405 = pneg %p404
        // Predicated region
        $region175: #{tpu_custom_call.1} parent=23 // pred_check
          _
        $region176: #{tpu_custom_call.1} parent=23 // pred_check_branch
          %407 = sbr.rel (%p404) target = $region178
        $region177: #{tpu_custom_call.1} parent=23 // pred_region
          %s422 = sand.u32 1, 7
          %p423 = scmp.eq.s32.totalorder %s422, 0
          %p424 = pneg %p423
          // Predicated region
          $region190: #{tpu_custom_call.1} parent=177 // pred_check
            _
          $region191: #{tpu_custom_call.1} parent=177 // pred_check_branch
            %426 = sbr.rel (%p423) target = $region193
          $region192: #{tpu_custom_call.1} parent=177 // pred_region
            %s427 = sand.u32 1, 7
            %s428 = ssub.s32 1, %s427
            %s429 = scalar_lea.vmem %s401, %s428
            %s430 = ssub.s32 1, %s427
            %s431 = scalar_lea.vmem %s402, %s430 [#allocation2]
            %s432 = sshllo.u32 0, %s427
            loop: start=0, step=1, limit=1
            $region194: #{tpu_custom_call.1} parent=192 // loop_pre_header
              _
            $region195: #{tpu_custom_call.1} parent=192 // loop_header
              %s434 = sphi 0, %s438
              %p435 = scmp.ge.s32.totalorder %s434, 1
              %s439 = sphi %s429, %s429
              %s440 = sphi %s431, %s431
            $region196: #{tpu_custom_call.1} parent=192 // loop_header_branch
              %437 = sbr.rel (%p435) target = $region200
            $region197: #{tpu_custom_call.1} parent=192 // loop_body
              %v441 = vld [vmem:[%s439] sm:%s432]
              %442 = vst [vmem:[%s440] sm:%s432] %v441
            $region198: #{tpu_custom_call.1} parent=192 // loop_footer
              %s438 = sadd.s32 1, %s434
            $region199: #{tpu_custom_call.1} parent=192 // loop_footer_branch
              %433 = sbr.rel target = $region195
            $region200: #{tpu_custom_call.1} parent=192 // loop_exit
              _
          $region193: #{tpu_custom_call.1} parent=177 // pred_fallthru
            _
        $region178: #{tpu_custom_call.1} parent=23 // pred_fallthru
          _
        // Predicated region
        $region179: #{tpu_custom_call.1} parent=23 // pred_check
          %p408 = pneg %p404
        $region180: #{tpu_custom_call.1} parent=23 // pred_check_branch
          %410 = sbr.rel (%p408) target = $region182
        $region181: #{tpu_custom_call.1} parent=23 // pred_region
          %s411 = sshllo.u32 0, 1
          loop: start=0, step=1, limit=1
          $region183: #{tpu_custom_call.1} parent=181 // loop_pre_header
            _
          $region184: #{tpu_custom_call.1} parent=181 // loop_header
            %s413 = sphi 0, %s417
            %p414 = scmp.ge.s32.totalorder %s413, 1
            %s418 = sphi %s401, %s401
            %s419 = sphi %s402, %s402
          $region185: #{tpu_custom_call.1} parent=181 // loop_header_branch
            %416 = sbr.rel (%p414) target = $region189
          $region186: #{tpu_custom_call.1} parent=181 // loop_body
            %v420 = vld [vmem:[%s418] sm:%s411]
            %421 = vst [vmem:[%s419] sm:%s411] %v420
          $region187: #{tpu_custom_call.1} parent=181 // loop_footer
            %s417 = sadd.s32 1, %s413
          $region188: #{tpu_custom_call.1} parent=181 // loop_footer_branch
            %412 = sbr.rel target = $region184
          $region189: #{tpu_custom_call.1} parent=181 // loop_exit
            _
        $region182: #{tpu_custom_call.1} parent=23 // pred_fallthru
          _
        // Predicated region
        $region201: #{tpu_custom_call.1} parent=23 // pred_check
          _
        $region202: #{tpu_custom_call.1} parent=23 // pred_check_branch
          %445 = sbr.rel (0) target = $region204
        $region203: #{tpu_custom_call.1} parent=23 // pred_region
          %446 = vsyncadd [#allocation3], 16
        $region204: #{tpu_custom_call.1} parent=23 // pred_fallthru
          _
        %s447 = sadd.s32 %s136, 6
        %s448 = sld [smem:[#allocation5 + %s447]]
        %p449 = scmp.gt.s32.totalorder %s448, 0
        %s450 = scalar_select %p449, %s448, 0
        %p451 = scmp.lt.s32.totalorder %s450, 63
        %s452 = scalar_select %p451, %s450, 63
        %s453 = scalar_lea.vmem %s2, %s452
        %s454 = scalar_lea.vmem [#allocation2], 6
        %p456 = scmp.lt.u32.totalorder 1, 8
        %p457 = pneg %p456
        // Predicated region
        $region205: #{tpu_custom_call.1} parent=23 // pred_check
          _
        $region206: #{tpu_custom_call.1} parent=23 // pred_check_branch
          %459 = sbr.rel (%p456) target = $region208
        $region207: #{tpu_custom_call.1} parent=23 // pred_region
          %s474 = sand.u32 1, 7
          %p475 = scmp.eq.s32.totalorder %s474, 0
          %p476 = pneg %p475
          // Predicated region
          $region220: #{tpu_custom_call.1} parent=207 // pred_check
            _
          $region221: #{tpu_custom_call.1} parent=207 // pred_check_branch
            %478 = sbr.rel (%p475) target = $region223
          $region222: #{tpu_custom_call.1} parent=207 // pred_region
            %s479 = sand.u32 1, 7
            %s480 = ssub.s32 1, %s479
            %s481 = scalar_lea.vmem %s453, %s480
            %s482 = ssub.s32 1, %s479
            %s483 = scalar_lea.vmem %s454, %s482 [#allocation2]
            %s484 = sshllo.u32 0, %s479
            loop: start=0, step=1, limit=1
            $region224: #{tpu_custom_call.1} parent=222 // loop_pre_header
              _
            $region225: #{tpu_custom_call.1} parent=222 // loop_header
              %s486 = sphi 0, %s490
              %p487 = scmp.ge.s32.totalorder %s486, 1
              %s491 = sphi %s481, %s481
              %s492 = sphi %s483, %s483
            $region226: #{tpu_custom_call.1} parent=222 // loop_header_branch
              %489 = sbr.rel (%p487) target = $region230
            $region227: #{tpu_custom_call.1} parent=222 // loop_body
              %v493 = vld [vmem:[%s491] sm:%s484]
              %494 = vst [vmem:[%s492] sm:%s484] %v493
            $region228: #{tpu_custom_call.1} parent=222 // loop_footer
              %s490 = sadd.s32 1, %s486
            $region229: #{tpu_custom_call.1} parent=222 // loop_footer_branch
              %485 = sbr.rel target = $region225
            $region230: #{tpu_custom_call.1} parent=222 // loop_exit
              _
          $region223: #{tpu_custom_call.1} parent=207 // pred_fallthru
            _
        $region208: #{tpu_custom_call.1} parent=23 // pred_fallthru
          _
        // Predicated region
        $region209: #{tpu_custom_call.1} parent=23 // pred_check
          %p460 = pneg %p456
        $region210: #{tpu_custom_call.1} parent=23 // pred_check_branch
          %462 = sbr.rel (%p460) target = $region212
        $region211: #{tpu_custom_call.1} parent=23 // pred_region
          %s463 = sshllo.u32 0, 1
          loop: start=0, step=1, limit=1
          $region213: #{tpu_custom_call.1} parent=211 // loop_pre_header
            _
          $region214: #{tpu_custom_call.1} parent=211 // loop_header
            %s465 = sphi 0, %s469
            %p466 = scmp.ge.s32.totalorder %s465, 1
            %s470 = sphi %s453, %s453
            %s471 = sphi %s454, %s454
          $region215: #{tpu_custom_call.1} parent=211 // loop_header_branch
            %468 = sbr.rel (%p466) target = $region219
          $region216: #{tpu_custom_call.1} parent=211 // loop_body
            %v472 = vld [vmem:[%s470] sm:%s463]
            %473 = vst [vmem:[%s471] sm:%s463] %v472
          $region217: #{tpu_custom_call.1} parent=211 // loop_footer
            %s469 = sadd.s32 1, %s465
          $region218: #{tpu_custom_call.1} parent=211 // loop_footer_branch
            %464 = sbr.rel target = $region214
          $region219: #{tpu_custom_call.1} parent=211 // loop_exit
            _
        $region212: #{tpu_custom_call.1} parent=23 // pred_fallthru
          _
        // Predicated region
        $region231: #{tpu_custom_call.1} parent=23 // pred_check
          _
        $region232: #{tpu_custom_call.1} parent=23 // pred_check_branch
          %497 = sbr.rel (0) target = $region234
        $region233: #{tpu_custom_call.1} parent=23 // pred_region
          %498 = vsyncadd [#allocation3], 16
        $region234: #{tpu_custom_call.1} parent=23 // pred_fallthru
          _
        %s499 = sadd.s32 %s136, 7
        %s500 = sld [smem:[#allocation5 + %s499]]
        %p501 = scmp.gt.s32.totalorder %s500, 0
        %s502 = scalar_select %p501, %s500, 0
        %p503 = scmp.lt.s32.totalorder %s502, 63
        %s504 = scalar_select %p503, %s502, 63
        %s505 = scalar_lea.vmem %s2, %s504
        %s506 = scalar_lea.vmem [#allocation2], 7
        %p508 = scmp.lt.u32.totalorder 1, 8
        %p509 = pneg %p508
        // Predicated region
        $region235: #{tpu_custom_call.1} parent=23 // pred_check
          _
        $region236: #{tpu_custom_call.1} parent=23 // pred_check_branch
          %511 = sbr.rel (%p508) target = $region238
        $region237: #{tpu_custom_call.1} parent=23 // pred_region
          %s526 = sand.u32 1, 7
          %p527 = scmp.eq.s32.totalorder %s526, 0
          %p528 = pneg %p527
          // Predicated region
          $region250: #{tpu_custom_call.1} parent=237 // pred_check
            _
          $region251: #{tpu_custom_call.1} parent=237 // pred_check_branch
            %530 = sbr.rel (%p527) target = $region253
          $region252: #{tpu_custom_call.1} parent=237 // pred_region
            %s531 = sand.u32 1, 7
            %s532 = ssub.s32 1, %s531
            %s533 = scalar_lea.vmem %s505, %s532
            %s534 = ssub.s32 1, %s531
            %s535 = scalar_lea.vmem %s506, %s534 [#allocation2]
            %s536 = sshllo.u32 0, %s531
            loop: start=0, step=1, limit=1
            $region254: #{tpu_custom_call.1} parent=252 // loop_pre_header
              _
            $region255: #{tpu_custom_call.1} parent=252 // loop_header
              %s538 = sphi 0, %s542
              %p539 = scmp.ge.s32.totalorder %s538, 1
              %s543 = sphi %s533, %s533
              %s544 = sphi %s535, %s535
            $region256: #{tpu_custom_call.1} parent=252 // loop_header_branch
              %541 = sbr.rel (%p539) target = $region260
            $region257: #{tpu_custom_call.1} parent=252 // loop_body
              %v545 = vld [vmem:[%s543] sm:%s536]
              %546 = vst [vmem:[%s544] sm:%s536] %v545
            $region258: #{tpu_custom_call.1} parent=252 // loop_footer
              %s542 = sadd.s32 1, %s538
            $region259: #{tpu_custom_call.1} parent=252 // loop_footer_branch
              %537 = sbr.rel target = $region255
            $region260: #{tpu_custom_call.1} parent=252 // loop_exit
              _
          $region253: #{tpu_custom_call.1} parent=237 // pred_fallthru
            _
        $region238: #{tpu_custom_call.1} parent=23 // pred_fallthru
          _
        // Predicated region
        $region239: #{tpu_custom_call.1} parent=23 // pred_check
          %p512 = pneg %p508
        $region240: #{tpu_custom_call.1} parent=23 // pred_check_branch
          %514 = sbr.rel (%p512) target = $region242
        $region241: #{tpu_custom_call.1} parent=23 // pred_region
          %s515 = sshllo.u32 0, 1
          loop: start=0, step=1, limit=1
          $region243: #{tpu_custom_call.1} parent=241 // loop_pre_header
            _
          $region244: #{tpu_custom_call.1} parent=241 // loop_header
            %s517 = sphi 0, %s521
            %p518 = scmp.ge.s32.totalorder %s517, 1
            %s522 = sphi %s505, %s505
            %s523 = sphi %s506, %s506
          $region245: #{tpu_custom_call.1} parent=241 // loop_header_branch
            %520 = sbr.rel (%p518) target = $region249
          $region246: #{tpu_custom_call.1} parent=241 // loop_body
            %v524 = vld [vmem:[%s522] sm:%s515]
            %525 = vst [vmem:[%s523] sm:%s515] %v524
          $region247: #{tpu_custom_call.1} parent=241 // loop_footer
            %s521 = sadd.s32 1, %s517
          $region248: #{tpu_custom_call.1} parent=241 // loop_footer_branch
            %516 = sbr.rel target = $region244
          $region249: #{tpu_custom_call.1} parent=241 // loop_exit
            _
        $region242: #{tpu_custom_call.1} parent=23 // pred_fallthru
          _
        // Predicated region
        $region261: #{tpu_custom_call.1} parent=23 // pred_check
          _
        $region262: #{tpu_custom_call.1} parent=23 // pred_check_branch
          %549 = sbr.rel (0) target = $region264
        $region263: #{tpu_custom_call.1} parent=23 // pred_region
          %550 = vsyncadd [#allocation3], 16
        $region264: #{tpu_custom_call.1} parent=23 // pred_fallthru
          _
        %s551 = sld [smem:[#allocation5 + %s136]]
        %s552 = smul.u32 1, 1
        %s553 = sshll.u32 %s552, 4
        %554 = dma.done [#allocation3], %s553
        %s555 = sld [smem:[#allocation5 + %s187]]
        %s556 = sshll.u32 %s552, 4
        %557 = dma.done [#allocation3], %s556
        %s558 = sld [smem:[#allocation5 + %s239]]
        %s559 = sshll.u32 %s552, 4
        %560 = dma.done [#allocation3], %s559
        %s561 = sld [smem:[#allocation5 + %s291]]
        %s562 = sshll.u32 %s552, 4
        %563 = dma.done [#allocation3], %s562
        %s564 = sld [smem:[#allocation5 + %s343]]
        %s565 = sshll.u32 %s552, 4
        %566 = dma.done [#allocation3], %s565
        %s567 = sld [smem:[#allocation5 + %s395]]
        %s568 = sshll.u32 %s552, 4
        %569 = dma.done [#allocation3], %s568
        %s570 = sld [smem:[#allocation5 + %s447]]
        %s571 = sshll.u32 %s552, 4
        %572 = dma.done [#allocation3], %s571
        %s573 = sld [smem:[#allocation5 + %s499]]
        %s574 = sshll.u32 %s552, 4
        %575 = dma.done [#allocation3], %s574
        %v576 = vld [vmem:[#allocation2] sm:$0xff]
        %v577 = vmul.f32 %v576, 5.656854
        %v578 = vld [vmem:[%s133] sm:$0xff]
        %v579 = vadd.f32 %v577, %v578
        %vm580 = vcmask 261120
        %581 = vst.msk [vmem:[%s129] sm:$0xff] %vm580, %v579
        %s582 = sand.u32 %s71, 1
        %s583 = scalar_lea.sflag [#allocation7], %s582
        %s584 = sand.u32 %s71, 1
        %s585 = smul.addr %s584, 8
        %s586 = scalar_lea.vmem [#allocation6], %s585
        // Predicated region
        $region265: #{tpu_custom_call.1} parent=23 // pred_check
          %p587 = pneg %p81
        $region266: #{tpu_custom_call.1} parent=23 // pred_check_branch
          %589 = sbr.rel (%p587) target = $region268
        $region267: #{tpu_custom_call.1} parent=23 // pred_region
          %s591 = ssub.s32 128, 128
          %592 = vsyncadd %s583, %s591
          %s593 = sadd.s32 %s27, %s28
          %s594 = smul.addr %s593, 128
          %s595 = scalar_lea.hbm %s3, %s594
          %s597 = sshll.u32 %s586, 4
          %s598 = int_to_ptr.vmem [resolvable:$true] %s597
          %600 = dma.vmem_to_hbm [thread:$0]  %s598, 128, %s595, %s583
        $region268: #{tpu_custom_call.1} parent=23 // pred_fallthru
          _
      $region24: #{tpu_custom_call.1} parent=5 // pred_fallthru
        _
      %p601 = scmp.le.s32.totalorder 2, %s18
      // Predicated region
      $region269: #{tpu_custom_call.1} parent=5 // pred_check
        %p602 = pneg %p601
      $region270: #{tpu_custom_call.1} parent=5 // pred_check_branch
        %604 = sbr.rel (%p602) target = $region272
      $region271: #{tpu_custom_call.1} parent=5 // pred_region
        %s605 = ssub.s32 %s18, 2
        // Predicated region
        $region273: #{tpu_custom_call.1} parent=271 // pred_check
          %p606 = pneg %p87
        $region274: #{tpu_custom_call.1} parent=271 // pred_check_branch
          %608 = sbr.rel (%p606) target = $region276
        $region275: #{tpu_custom_call.1} parent=271 // pred_region
          %s609 = sand.u32 %s72, 1
          %s610 = scalar_lea.sflag [#allocation7], %s609
          %s611 = sand.u32 %s72, 1
          %s612 = smul.addr %s611, 8
          %s613 = scalar_lea.vmem [#allocation6], %s612
          %614 = dma.done %s610, 128
        $region276: #{tpu_custom_call.1} parent=271 // pred_fallthru
          _
      $region272: #{tpu_custom_call.1} parent=5 // pred_fallthru
        _
    $region6: #{tpu_custom_call.1} parent=1 // loop_footer
      %s22 = sadd.s32 1, %s18
    $region7: #{tpu_custom_call.1} parent=1 // loop_footer_branch
      %17 = sbr.rel target = $region3
    $region8: #{tpu_custom_call.1} parent=1 // loop_exit
      _
    %615 = vsyncpa [#allocation7], 1
    %s616 = scalar_lea.sflag [#allocation7], 1
    %617 = vsyncpa %s616, 1
  %618 = vsyncmov [#allocation3]
  %s619 = vpop.sfrf %618
  %p620 = scmp.eq.s32.totalorder %s619, 0
  %p621 = pneg %p620
  %623 = shalt.err (%p621)

</llo_original>
